<compile_context>
chip_gen: v5e
topology: v5e:2x2
jax: 0.10.0
libtpu: 0.0.40
codegen_flags: <defaults>
</compile_context>

<pallas_src>
import functools

import jax
import jax.numpy as jnp
from jax.experimental import pallas as pl
from jax.experimental.pallas import tpu as pltpu

_LANES = 128
_SUBLANES = 8
_MAX_ROW_TILE = 4096          # (4096,128) f32 = 2 MiB per input tile
_MAX_ACC_ROWS = 32            # up to 4 independent accumulator vregs


def _cdiv(a, b):
    return (a + b - 1) // b


def _round_up(a, b):
    return _cdiv(a, b) * b


def _sublane_multiple(dtype):
    # Minimum sublane tiling for packed dtypes: 8 for 32-bit, 16 for bf16, 32 for int8/bool.
    itemsize = jnp.dtype(dtype).itemsize
    return max(_SUBLANES, 32 // max(1, itemsize))


def _num_tensorcores():
    """Best-effort TensorCore count per chip; conservative (1) if unknown."""
    try:
        info = pltpu.get_tpu_info()
        for attr in ("num_cores", "num_tensorcores", "tensorcore_count", "cores_per_chip"):
            v = getattr(info, attr, None)
            if isinstance(v, int) and v > 0:
                return v
    except Exception:
        pass
    try:
        kind = jax.devices()[0].device_kind.lower()
        if "v7" in kind or "7x" in kind:
            return 2
    except Exception:
        pass
    return 1


def _bce_elementwise(x, t):
    # Numerically-stable BCE with logits (identical to PyTorch):
    #   max(x, 0) - x * t + log(1 + exp(-|x|))
    return jnp.maximum(x, 0.0) - x * t + jnp.log1p(jnp.exp(-jnp.abs(x)))


def _make_bce_sum_kernel(rows, row_tile, total_blocks, bps, acc_rows):
    """Kernel producing per-split partial sums of element-wise BCE-with-logits.

    grid = (num_splits, bps); output block per split = (1, acc_rows, 128);
    acc_ref = (acc_rows, 128) f32 VMEM scratch resident across the j axis.
    All of rows/row_tile/total_blocks/bps/acc_rows are static Python ints.
    """
    needs_mask = (rows % row_tile) != 0   # only the last block can overhang

    def _fold(v):
        # Fold (row_tile,128) into the resident (acc_rows,128) accumulator:
        # pure VPU adds across independent vreg chains, hidden under the DMAs.
        return v.reshape(row_tile // acc_rows, acc_rows, _LANES).sum(axis=0)

    def kernel(x_ref, t_ref, o_ref, acc_ref):
        j = pl.program_id(1)

        @pl.when(j == 0)
        def _init():
            acc_ref[...] = jnp.zeros_like(acc_ref)

        # Upcast in VMEM (free VPU work) instead of materializing f32 copies in HBM.
        x = x_ref[...].astype(jnp.float32)
        t = t_ref[...].astype(jnp.float32)
        per = _bce_elementwise(x, t)

        if not needs_mask:
            # Interior (and exactly-fitting last) blocks: no mask arithmetic at all.
            acc_ref[...] += _fold(per)
        else:
            blk = pl.program_id(0) * bps + j
            last = total_blocks - 1

            if total_blocks > 1:
                @pl.when(blk != last)
                def _interior():
                    acc_ref[...] += _fold(per)

            @pl.when(blk == last)
            def _edge():
                # Rows past the array edge contain garbage (possibly NaN/Inf after
                # the transcendental) -- jnp.where is a true select, keep it.
                row_idx = jax.lax.broadcasted_iota(jnp.int32, per.shape, 0)
                valid = (blk * row_tile + row_idx) < rows   # rows < 2^31 for n < 2.7e11 elems
                acc_ref[...] += _fold(jnp.where(valid, per, jnp.float32(0.0)))

        @pl.when(j == pl.num_programs(1) - 1)
        def _finalize():
            o_ref[...] = acc_ref[...][None, :, :]

    return kernel


def _bce_partial_sums(x2d, t2d):
    rows = x2d.shape[0]
    sm = max(_sublane_multiple(x2d.dtype), _sublane_multiple(t2d.dtype))
    row_tile = min(_MAX_ROW_TILE, _round_up(rows, sm))
    total_blocks = _cdiv(rows, row_tile)

    # Only split across cores when the chip has exactly 2 TensorCores (v7x) and
    # the split keeps the grid exact (no clamped / duplicated blocks).
    if _num_tensorcores() == 2 and total_blocks >= 2 and total_blocks % 2 == 0:
        num_splits = 2
        dim_sem = (pltpu.CORE_PARALLEL, pltpu.ARBITRARY)
    else:
        num_splits = 1
        dim_sem = ("arbitrary", "arbitrary")
    bps = total_blocks // num_splits          # exact by construction

    if row_tile % _MAX_ACC_ROWS == 0:
        acc_rows = _MAX_ACC_ROWS
    elif row_tile % 16 == 0:
        acc_rows = 16
    else:
        acc_rows = _SUBLANES

    kernel = _make_bce_sum_kernel(rows, row_tile, total_blocks, bps, acc_rows)

    def in_map(c, j):
        return (c * bps + j, 0)

    return pl.pallas_call(
        kernel,
        out_shape=jax.ShapeDtypeStruct((num_splits, acc_rows, _LANES), jnp.float32),
        grid_spec=pltpu.PrefetchScalarGridSpec(
            num_scalar_prefetch=0,
            grid=(num_splits, bps),
            in_specs=[
                pl.BlockSpec((row_tile, _LANES), in_map),
                pl.BlockSpec((row_tile, _LANES), in_map),
            ],
            out_specs=pl.BlockSpec((1, acc_rows, _LANES), lambda c, j: (c, 0, 0)),
            scratch_shapes=[pltpu.VMEM((acc_rows, _LANES), jnp.float32)],
        ),
        compiler_params=pltpu.CompilerParams(dimension_semantics=dim_sem),
    )(x2d, t2d)


@functools.partial(jax.jit, static_argnames=("alpha", "gamma", "reduce"))
def focal_loss(inputs, targets, alpha=1.0, gamma=2.0, reduce=True):
    """FocalLoss.forward — inputs/targets are logits/labels of identical shape (e.g. NCHW)."""
    n_elem = inputs.size
    flat_x = inputs.reshape(-1)
    flat_t = targets.reshape(-1)

    n_main = (n_elem // _LANES) * _LANES
    rows = n_main // _LANES

    bce_sum = jnp.float32(0.0)

    # <128-element straggler tail: plain jnp (no jnp.pad copy of the full tensors).
    if n_main != n_elem:
        tail_x = flat_x[n_main:].astype(jnp.float32)
        tail_t = flat_t[n_main:].astype(jnp.float32)
        bce_sum = bce_sum + jnp.sum(_bce_elementwise(tail_x, tail_t))

    if rows > 0:
        x2d = flat_x[:n_main].reshape(rows, _LANES)   # contiguous reshape: free
        t2d = flat_t[:n_main].reshape(rows, _LANES)
        partials = _bce_partial_sums(x2d, t2d)
        bce_sum = bce_sum + jnp.sum(partials)

    # BCEWithLogitsLoss default reduction='mean' -> scalar.
    bce_mean = bce_sum / jnp.float32(n_elem)

    # Scalar focal modulation (matches PyTorch applying it to the scalar mean BCE).
    pt = jnp.exp(-bce_mean)
    f_loss = alpha * (1.0 - pt) ** gamma * bce_mean
    if reduce:
        return jnp.mean(f_loss)   # mean of a scalar == the scalar
    return f_loss                 # TODO(synk): PyTorch returns None when reduce=False


def _reference(inputs, targets, alpha=1.0, gamma=2.0):
    x = inputs.astype(jnp.float32)
    t = targets.astype(jnp.float32)
    bce = jnp.mean(_bce_elementwise(x, t))
    pt = jnp.exp(-bce)
    return alpha * (1.0 - pt) ** gamma * bce


if __name__ == "__main__":
    key = jax.random.PRNGKey(0)
    k1, k2 = jax.random.split(key)
    # Small NCHW shapes: batch=2, channels=4, spatial=16x16
    inputs = jax.random.normal(k1, (2, 4, 16, 16), dtype=jnp.float32)   # logits
    targets = (jax.random.uniform(k2, (2, 4, 16, 16)) > 0.5).astype(jnp.float32)

    out = focal_loss(inputs, targets, alpha=1.0, gamma=2.0, reduce=True)
    out = jax.block_until_ready(out)

    ref = _reference(inputs, targets)
    assert jnp.allclose(out, ref, rtol=1e-5, atol=1e-6), (out, ref)
    print("KERNEL_OK")
</pallas_src>

<mosaic_0001>
module attributes {stable_mosaic.version = 11 : i64} {
  func.func @kernel(%arg0: i32, %arg1: i32, %arg2: memref<16x128xf32, #tpu.memory_space<vmem>>, %arg3: memref<16x128xf32, #tpu.memory_space<vmem>>, %arg4: memref<1x16x128xf32, #tpu.memory_space<vmem>>, %arg5: memref<16x128xf32, #tpu.memory_space<vmem>>) attributes {dimension_semantics = [#tpu.dimension_semantics<arbitrary>, #tpu.dimension_semantics<arbitrary>], iteration_bounds = array<i64: 1, 1>, scalar_prefetch = 0 : i64, scratch_operands = 1 : i64, tpu.core_type = #tpu.core_type<tc>, window_params = [{transform_indices = @transform_0, window_bounds = array<i64: 16, 128>}, {transform_indices = @transform_1, window_bounds = array<i64: 16, 128>}, {transform_indices = @transform_2, window_bounds = array<i64: 1, 16, 128>}]} {
    %c0_i32 = arith.constant 0 : i32
    %0 = arith.cmpi eq, %arg1, %c0_i32 : i32
    %1 = arith.extui %0 : i1 to i32
    %c0_i32_0 = arith.constant 0 : i32
    %2 = arith.cmpi ne, %1, %c0_i32_0 : i32
    scf.if %2 {
      %cst_12 = arith.constant 0.000000e+00 : f32
      %23 = vector.broadcast %cst_12 : f32 to vector<16x128xf32>
      %c0_13 = arith.constant 0 : index
      %c0_14 = arith.constant 0 : index
      %24 = vector.load %arg5[%c0_13, %c0_14] : memref<16x128xf32, #tpu.memory_space<vmem>>, vector<16x128xf32>
      tpu.vector_store %arg5[%c0_13, %c0_14], %23 {strides = array<i32>} : memref<16x128xf32, #tpu.memory_space<vmem>>, vector<16x128xf32>,
    } else {
    }
    %c0 = arith.constant 0 : index
    %c0_1 = arith.constant 0 : index
    %3 = vector.load %arg2[%c0, %c0_1] : memref<16x128xf32, #tpu.memory_space<vmem>>, vector<16x128xf32>
    %c0_2 = arith.constant 0 : index
    %c0_3 = arith.constant 0 : index
    %4 = vector.load %arg3[%c0_2, %c0_3] : memref<16x128xf32, #tpu.memory_space<vmem>>, vector<16x128xf32>
    %cst = arith.constant 0.000000e+00 : f32
    %5 = vector.broadcast %cst : f32 to vector<16x128xf32>
    %6 = arith.maximumf %3, %5 : vector<16x128xf32>
    %7 = arith.mulf %3, %4 : vector<16x128xf32>
    %8 = arith.subf %6, %7 : vector<16x128xf32>
    %9 = math.absf %3 : vector<16x128xf32>
    %cst_4 = arith.constant 0.000000e+00 : f32
    %10 = vector.broadcast %cst_4 : f32 to vector<16x128xf32>
    %11 = arith.subf %10, %9 : vector<16x128xf32>
    %12 = math.exp %11 : vector<16x128xf32>
    %13 = math.log1p %12 : vector<16x128xf32>
    %14 = arith.addf %8, %13 : vector<16x128xf32>
    %c0_5 = arith.constant 0 : index
    %c0_6 = arith.constant 0 : index
    %15 = vector.load %arg5[%c0_5, %c0_6] : memref<16x128xf32, #tpu.memory_space<vmem>>, vector<16x128xf32>
    %16 = vector.shape_cast %14 : vector<16x128xf32> to vector<1x16x128xf32>
    %cst_7 = arith.constant dense<0.000000e+00> : vector<16x128xf32>
    %17 = vector.multi_reduction <add>, %16, %cst_7 [0] : vector<1x16x128xf32> to vector<16x128xf32>
    %18 = arith.addf %15, %17 : vector<16x128xf32>
    %c0_8 = arith.constant 0 : index
    %c0_9 = arith.constant 0 : index
    %19 = vector.load %arg5[%c0_8, %c0_9] : memref<16x128xf32, #tpu.memory_space<vmem>>, vector<16x128xf32>
    tpu.vector_store %arg5[%c0_8, %c0_9], %18 {strides = array<i32>} : memref<16x128xf32, #tpu.memory_space<vmem>>, vector<16x128xf32>,
    %c0_i32_10 = arith.constant 0 : i32
    %20 = arith.cmpi eq, %arg1, %c0_i32_10 : i32
    %21 = arith.extui %20 : i1 to i32
    %c0_i32_11 = arith.constant 0 : i32
    %22 = arith.cmpi ne, %21, %c0_i32_11 : i32
    scf.if %22 {
      %c0_12 = arith.constant 0 : index
      %c0_13 = arith.constant 0 : index
      %23 = vector.load %arg5[%c0_12, %c0_13] : memref<16x128xf32, #tpu.memory_space<vmem>>, vector<16x128xf32>
      %24 = vector.shape_cast %23 : vector<16x128xf32> to vector<1x16x128xf32>
      %c0_14 = arith.constant 0 : index
      %c0_15 = arith.constant 0 : index
      %c0_16 = arith.constant 0 : index
      %25 = vector.load %arg4[%c0_14, %c0_15, %c0_16] : memref<1x16x128xf32, #tpu.memory_space<vmem>>, vector<1x16x128xf32>
      tpu.vector_store %arg4[%c0_14, %c0_15, %c0_16], %24 {strides = array<i32>} : memref<1x16x128xf32, #tpu.memory_space<vmem>>, vector<1x16x128xf32>,
    } else {
    }
    return
  }
  func.func @transform_0(%arg0: i32, %arg1: i32) -> (i32, i32) {
    %c1_i32 = arith.constant 1 : i32
    %0 = arith.muli %arg0, %c1_i32 : i32
    %1 = arith.addi %0, %arg1 : i32
    %c0_i32 = arith.constant 0 : i32
    %c0_i32_0 = arith.constant 0 : i32
    return %1, %c0_i32 : i32, i32
  }
  func.func @transform_1(%arg0: i32, %arg1: i32) -> (i32, i32) {
    %c1_i32 = arith.constant 1 : i32
    %0 = arith.muli %arg0, %c1_i32 : i32
    %1 = arith.addi %0, %arg1 : i32
    %c0_i32 = arith.constant 0 : i32
    %c0_i32_0 = arith.constant 0 : i32
    return %1, %c0_i32 : i32, i32
  }
  func.func @transform_2(%arg0: i32, %arg1: i32) -> (i32, i32, i32) {
    %c0_i32 = arith.constant 0 : i32
    %c0_i32_0 = arith.constant 0 : i32
    %c0_i32_1 = arith.constant 0 : i32
    return %arg0, %c0_i32, %c0_i32_0 : i32, i32, i32
  }
}

</mosaic_0001>

<llo_original>
// kernel: focal_loss.1
$region0: #{focal_loss.1}
  #allocation0 [shape = 'u32[]', space=smem, size = 0x4, offset = 0x4, fixed_abs, tag = 'smem constant byte address 0x4 - core index']
  #allocation1 [shape = 'u32[72,128]{1,0:T(1,128)}', space=vmem, size = 0x9000, scoped, tag = 'internal scratch']
  #allocation2 [shape = 'f32[16,128]{1,0:T(8,128)}', space=vmem, size = 0x2000, scoped, tag = 'scratch operand']
  %s0 = inlined_call_operand.vmem [shape: f32[16,128], index: 0, kind: input, shape index: {}]
  %s1 = inlined_call_operand.vmem [shape: f32[16,128], index: 1, kind: input, shape index: {}]
  %s2 = inlined_call_operand.vmem [shape: f32[1,16,128], index: 2, kind: output, shape index: {}]
  %s3 = sld [smem:[#allocation0]]
  $region26: #{focal_loss.1} parent=0
    _
  %s5 = ssub.s32 1, %s3
  %s6 = scalar_select 0, %s5, %s3
  // Predicated region
  $region2: #{focal_loss.1} parent=0 // pred_check
    _
  $region3: #{focal_loss.1} parent=0 // pred_check_branch
    %8 = sbr.rel (0) target = $region5
  $region4: #{focal_loss.1} parent=0 // pred_region
    %s9 = sadd.s32 0, 0
    %s10 = smul.u32 2, %s9
    %p11 = scmp.lt.s32.totalorder %s10, 1
    %s12 = scalar_select %p11, %s10, 1
    %s13 = smul.addr %s12, 8
    %s14 = scalar_lea.vmem %s0, %s13
    %s15 = sadd.s32 0, 0
    %s16 = smul.u32 2, %s15
  $region5: #{focal_loss.1} parent=0 // pred_fallthru
    _
  // Predicated region
  $region6: #{focal_loss.1} parent=0 // pred_check
    _
  $region7: #{focal_loss.1} parent=0 // pred_check_branch
    %18 = sbr.rel (0) target = $region9
  $region8: #{focal_loss.1} parent=0 // pred_region
    %s19 = sadd.s32 0, 0
    %s20 = smul.u32 2, %s19
    %p21 = scmp.lt.s32.totalorder %s20, 1
    %s22 = scalar_select %p21, %s20, 1
    %s23 = smul.addr %s22, 8
    %s24 = scalar_lea.vmem %s1, %s23
    %s25 = sadd.s32 0, 0
    %s26 = smul.u32 2, %s25
  $region9: #{focal_loss.1} parent=0 // pred_fallthru
    _
  %s27 = sadd.s32 0, 0
  %s28 = smul.u32 2, %s27
  %p29 = scmp.lt.s32.totalorder %s28, 1
  %s30 = scalar_select %p29, %s28, 1
  %s31 = smul.addr %s30, 8
  %s32 = scalar_lea.vmem %s0, %s31
  %s33 = sadd.s32 0, 0
  %s34 = smul.u32 2, %s33
  %p35 = scmp.lt.s32.totalorder %s34, 1
  %s36 = scalar_select %p35, %s34, 1
  %s37 = smul.addr %s36, 8
  %s38 = scalar_lea.vmem %s1, %s37
  %s39 = sadd.s32 0, 0
  %s40 = smul.u32 2, %s39
  %p41 = scmp.lt.s32.totalorder %s40, 1
  %s42 = scalar_select %p41, %s40, 1
  %s43 = smul.addr %s42, 8
  %s44 = scalar_lea.vmem %s0, %s43
  %s45 = sadd.s32 0, 0
  %s46 = smul.u32 2, %s45
  %s47 = sadd.s32 0, 0
  %s48 = smul.u32 2, %s47
  %p49 = scmp.lt.s32.totalorder %s48, 1
  %s50 = scalar_select %p49, %s48, 1
  %s51 = smul.addr %s50, 8
  %s52 = scalar_lea.vmem %s1, %s51
  %s53 = sadd.s32 0, 0
  %s54 = smul.u32 2, %s53
  %p55 = scmp.eq.s32.totalorder 0, 0
  // Predicated region
  $region10: #{focal_loss.1} parent=0 // pred_check
    %p56 = pneg %p55
  $region11: #{focal_loss.1} parent=0 // pred_check_branch
    %58 = sbr.rel (%p56) target = $region13
  $region12: #{focal_loss.1} parent=0 // pred_region
    %59 = vst [vmem:[#allocation2] sm:$0xff] 0.0
    %60 = vst [vmem:[#allocation2 + $0x8] sm:$0xff] 0.0
  $region13: #{focal_loss.1} parent=0 // pred_fallthru
    _
  %v61 = vld [vmem:[%s44] sm:$0xff]
  %v62 = vld [vmem:[%s44 + $0x8] sm:$0xff]
  %v63 = vld [vmem:[%s52] sm:$0xff]
  %v64 = vld [vmem:[%s52 + $0x8] sm:$0xff]
  %v65 = vmax.f32 %v61, 0.0
  %v66 = vmax.f32 %v62, 0.0
  %v67 = vmul.f32 %v61, %v63
  %v68 = vmul.f32 %v62, %v64
  %v69 = vsub.f32 %v65, %v67
  %v70 = vsub.f32 %v66, %v68
  %v71 = vand.u32 2147483647, %v61
  %v72 = vand.u32 2147483647, %v62
  %v73 = vsub.f32 0.0, %v71
  %v74 = vsub.f32 0.0, %v72
  %v75 = vmul.f32 %v73, 1.442695
  %v76 = vpow.pop %v75
  %v77 = vmul.f32 %v74, 1.442695
  %v78 = vpow.pop %v77
  %v79 = vadd.f32 %v76, 1.0
  %v80 = vlog2.pop %v79
  %v81 = vmul.f32 %v80, 0.6931472
  %v82 = vmul.f32 -0.5, %v76
  %v83 = vadd.f32 %v82, 1.0
  %v84 = vmul.f32 %v83, %v76
  %v85 = vand.u32 2147483647, %v76
  %vm86 = vcmp.lt.f32.partialorder %v85, 0.0004427343
  %v87 = vsel %vm86, %v84, %v81
  %v88 = vadd.f32 %v78, 1.0
  %v89 = vlog2.pop %v88
  %v90 = vmul.f32 %v89, 0.6931472
  %v91 = vmul.f32 -0.5, %v78
  %v92 = vadd.f32 %v91, 1.0
  %v93 = vmul.f32 %v92, %v78
  %v94 = vand.u32 2147483647, %v78
  %vm95 = vcmp.lt.f32.partialorder %v94, 0.0004427343
  %v96 = vsel %vm95, %v93, %v90
  %v97 = vadd.f32 %v69, %v87
  %v98 = vadd.f32 %v70, %v96
  %v99 = vld [vmem:[#allocation2] sm:$0xff]
  %v100 = vld [vmem:[#allocation2 + $0x8] sm:$0xff]
  %v101 = vadd.f32 %v97, 0.0
  %v102 = vadd.f32 %v98, 0.0
  %v103 = vadd.f32 %v99, %v101
  %v104 = vadd.f32 %v100, %v102
  %105 = vst [vmem:[#allocation2] sm:$0xff] %v103
  %106 = vst [vmem:[#allocation2 + $0x8] sm:$0xff] %v104
  // Predicated region
  $region14: #{focal_loss.1} parent=0 // pred_check
    %p107 = pneg %p55
  $region15: #{focal_loss.1} parent=0 // pred_check_branch
    %109 = sbr.rel (%p107) target = $region17
  $region16: #{focal_loss.1} parent=0 // pred_region
    %v110 = vld [vmem:[#allocation2] sm:$0xff]
    %v111 = vld [vmem:[#allocation2 + $0x8] sm:$0xff]
    %112 = vst [vmem:[%s2] sm:$0xff] %v110
    %113 = vst [vmem:[%s2 + $0x8] sm:$0xff] %v111
  $region17: #{focal_loss.1} parent=0 // pred_fallthru
    _
  // Predicated region
  $region18: #{focal_loss.1} parent=0 // pred_check
    _
  $region19: #{focal_loss.1} parent=0 // pred_check_branch
    %115 = sbr.rel (0) target = $region21
  $region20: #{focal_loss.1} parent=0 // pred_region
    _
  $region21: #{focal_loss.1} parent=0 // pred_fallthru
    _
  // Predicated region
  $region22: #{focal_loss.1} parent=0 // pred_check
    _
  $region23: #{focal_loss.1} parent=0 // pred_check_branch
    %117 = sbr.rel (0) target = $region25
  $region24: #{focal_loss.1} parent=0 // pred_region
    _
  $region25: #{focal_loss.1} parent=0 // pred_fallthru
    _

</llo_original>
